<compile_context>
chip_gen: v7x
topology: tpu7x:2x2x1
jax: 0.10.0
libtpu: 0.0.40
codegen_flags: <defaults>
</compile_context>

<pallas_src>
import functools
import numpy as np
import jax
import jax.numpy as jnp
from jax import lax
from jax.experimental import pallas as pl
from jax.experimental.pallas import tpu as pltpu


# ---------------------------------------------------------------------------
# Kernel
# ---------------------------------------------------------------------------
def _angle_alignment_kernel(x_ref, w_ref, dsel_ref, out_ref, *, scale):
    # x_ref:    (B,  Dp)      f32   resident full (padded) batch
    # w_ref:    (TA, B)       f32   center-weight rows for this anchor block
    # dsel_ref: (TA, n_p, B)  bf16  per-anchor (+1/-1) selection-difference rows
    # out_ref:  (TA, 1)       f32   per-anchor partial losses
    x = x_ref[...]                                   # (B, Dp)

    # centers for this anchor block: one small f32 MXU matmul (fused in-kernel)
    c = jnp.dot(w_ref[...], x, preferred_element_type=jnp.float32)   # (TA, Dp)

    vec = x[None, :, :] - c[:, None, :]              # (TA, B, Dp)
    sumsq = jnp.sum(vec * vec, axis=-1, keepdims=True)
    inv = lax.rsqrt(jnp.maximum(sumsq, 1e-24))       # == 1/max(||vec||,1e-12)
    vecn = (vec * inv).astype(jnp.bfloat16)          # bf16 MXU operand, f32 norm

    dsel = dsel_ref[...]                             # (TA, n_p, B) bf16
    # sel[t] = vecn[t][idx0] - vecn[t][idx1]   (gather+subtract as a matmul)
    sel = lax.dot_general(dsel, vecn, (((2,), (1,)), ((0,), (0,))),
                          preferred_element_type=jnp.float32)   # (TA, n_p, Dp)
    sel = sel.astype(jnp.bfloat16)
    # diff[t] = sel[t] @ vecn[t].T == ang[mask0[i]] - ang[mask1[i]] (ang never built)
    diff = lax.dot_general(sel, vecn, (((2,), (2,)), ((0,), (0,))),
                           preferred_element_type=jnp.float32)  # (TA, n_p, B)

    a = jnp.abs(diff)
    s = jnp.sum(jnp.sum(a, axis=-1), axis=-1, keepdims=True)    # (TA, 1)
    out_ref[...] = s * scale                          # scale = 1/(n_true*B*B)


# ---------------------------------------------------------------------------
# Wrapper
# ---------------------------------------------------------------------------
def angle_alignment_loss(x, w, dsel, n_true, *, ta=None):
    """x: (B, D) f32 features; w: (B, B) f32 center-weight matrix;
    dsel: (B, n_p, B) bf16 per-anchor selection-difference matrices (zero-row
    padded to n_p); n_true: real per-anchor pair count (mean divisor)."""
    B, D = x.shape
    n_p = dsel.shape[1]
    assert B % 8 == 0, "kernel assumes batch is a multiple of 8 (sublane tile)"
    if ta is None:
        ta = 8
    assert B % ta == 0 and ta % 8 == 0, "anchor tile must be 8-aligned and divide B"

    Dp = ((D + 127) // 128) * 128                    # lane-pad features (zeros)
    x_p = jnp.pad(x, ((0, 0), (0, Dp - D))) if Dp != D else x

    scale = 1.0 / (float(n_true) * float(B) * float(B))
    kern = functools.partial(_angle_alignment_kernel, scale=scale)

    partials = pl.pallas_call(
        kern,
        out_shape=jax.ShapeDtypeStruct((B, 1), jnp.float32),
        grid_spec=pltpu.PrefetchScalarGridSpec(
            num_scalar_prefetch=0,
            grid=(B // ta,),
            in_specs=[
                pl.BlockSpec((B, Dp), lambda t: (0, 0)),          # X resident
                pl.BlockSpec((ta, B), lambda t: (t, 0)),          # W rows block (f32)
                pl.BlockSpec((ta, n_p, B), lambda t: (t, 0, 0)),  # Dsel block (bf16)
            ],
            out_specs=pl.BlockSpec((ta, 1), lambda t: (t, 0)),    # per-anchor partials
        ),
        compiler_params=pltpu.CompilerParams(dimension_semantics=("parallel",)),
    )(x_p, w, dsel)

    return jnp.sum(partials)


# ---------------------------------------------------------------------------
# Host-side glue (integer label metadata -> W / Dsel), not the hot path
# ---------------------------------------------------------------------------
def build_host_glue(targets, subs):
    t = np.asarray(targets)
    s = np.asarray(subs)
    B = t.shape[0]

    same = (t[:, None] == t[None, :]) & (s[:, None] == s[None, :])
    W = same.astype(np.float32) / same.sum(1, keepdims=True).astype(np.float32)

    neq = t[:, None] != t[None, :]
    mask0 = neq & (s[None, :] == 0)
    mask1 = neq & (s[None, :] == 1)
    n0 = mask0.sum(1)
    n1 = mask1.sum(1)
    # The PyTorch broadcast `ang[mask0[i]] - ang[mask1[i]]` already requires n0[i]==n1[i].
    assert np.all(n0 == n1), "per-anchor sub-0 / sub-1 negative counts must match"
    # TODO(synk): support per-anchor-varying (ragged) counts; here we require a balanced batch.
    assert np.all(n0 == n0[0]), "kernel assumes a balanced batch (constant count per anchor)"
    n = int(n0[0])
    n_p = ((n + 7) // 8) * 8                           # sublane-pad with zero rows

    dsel = np.zeros((B, n_p, B), np.float32)
    rows = np.arange(n)
    for i in range(B):
        dsel[i, rows, np.nonzero(mask0[i])[0]] += 1.0
        dsel[i, rows, np.nonzero(mask1[i])[0]] -= 1.0
    return W, dsel, n, mask0, mask1


def reference_loss_numpy(x, W, mask0, mask1):
    x = np.asarray(x, dtype=np.float64)
    B = x.shape[0]
    centers = W.astype(np.float64) @ x
    loss = 0.0
    for i in range(B):
        vec = x - centers[i:i + 1]
        nrm = np.sqrt((vec ** 2).sum(-1, keepdims=True))
        vecn = vec / np.maximum(nrm, 1e-12)
        ang = vecn @ vecn.T
        idx0 = np.nonzero(mask0[i])[0]
        idx1 = np.nonzero(mask1[i])[0]
        loss += np.abs(ang[idx0] - ang[idx1]).mean()
    return loss / B


if __name__ == "__main__":
    # Small deterministic example: 2 identities x 2 subs x 2 samples = B of 8, D = 32.
    B, D = 8, 32
    targets = np.array([0, 0, 0, 0, 1, 1, 1, 1], dtype=np.int32)
    subs = np.array([0, 0, 1, 1, 0, 0, 1, 1], dtype=np.int32)

    key = jax.random.PRNGKey(0)
    x = jax.random.normal(key, (B, D), dtype=jnp.float32)

    W_np, dsel_np, n_true, mask0, mask1 = build_host_glue(targets, subs)
    w = jnp.asarray(W_np)
    dsel = jnp.asarray(dsel_np, dtype=jnp.bfloat16)    # {-1,0,+1} exact in bf16

    loss = angle_alignment_loss(x, w, dsel, n_true)
    loss = jax.block_until_ready(loss)

    ref = reference_loss_numpy(np.asarray(x), W_np, mask0, mask1)
    assert np.allclose(np.asarray(loss, dtype=np.float64), ref, atol=2e-2, rtol=2e-2), \
        f"mismatch: kernel={float(loss)} ref={ref}"

    print("KERNEL_OK")
</pallas_src>

<mosaic_0001>
module attributes {stable_mosaic.version = 11 : i64} {
  func.func @_angle_alignment_kernel(%arg0: i32, %arg1: memref<8x128xf32, #tpu.memory_space<vmem>>, %arg2: memref<8x8xf32, #tpu.memory_space<vmem>>, %arg3: memref<8x8x8xbf16, #tpu.memory_space<vmem>>, %arg4: memref<8x1xf32, #tpu.memory_space<vmem>>) attributes {dimension_semantics = [#tpu.dimension_semantics<parallel>], iteration_bounds = array<i64: 1>, scalar_prefetch = 0 : i64, scratch_operands = 0 : i64, tpu.core_type = #tpu.core_type<tc>, window_params = [{pipeline_mode = #tpu.pipeline_mode<synchronous>, transform_indices = @transform_0, window_bounds = array<i64: 8, 128>}, {transform_indices = @transform_1, window_bounds = array<i64: 8, 8>}, {transform_indices = @transform_2, window_bounds = array<i64: 8, 8, 8>}, {transform_indices = @transform_3, window_bounds = array<i64: 8, 1>}]} {
    %c0 = arith.constant 0 : index
    %c0_0 = arith.constant 0 : index
    %0 = vector.load %arg1[%c0, %c0_0] : memref<8x128xf32, #tpu.memory_space<vmem>>, vector<8x128xf32>
    %c0_1 = arith.constant 0 : index
    %c0_2 = arith.constant 0 : index
    %1 = vector.load %arg2[%c0_1, %c0_2] : memref<8x8xf32, #tpu.memory_space<vmem>>, vector<8x8xf32>
    %cst = arith.constant dense<0.000000e+00> : vector<8x128xf32>
    %2 = tpu.matmul %1, %0, %cst {dimension_numbers = #tpu.dot_dimension_numbers<[1], [0], [0], [1], [0, 0, 1, 1], [], []>} : vector<8x8xf32>, vector<8x128xf32>, vector<8x128xf32> -> vector<8x128xf32>
    %3 = vector.shape_cast %0 : vector<8x128xf32> to vector<1x8x128xf32>
    %4 = vector.shape_cast %2 : vector<8x128xf32> to vector<8x1x128xf32>
    %5 = vector.broadcast %3 : vector<1x8x128xf32> to vector<8x8x128xf32>
    %6 = vector.broadcast %4 : vector<8x1x128xf32> to vector<8x8x128xf32>
    %7 = arith.subf %5, %6 : vector<8x8x128xf32>
    %8 = arith.mulf %7, %7 : vector<8x8x128xf32>
    %cst_3 = arith.constant dense<0.000000e+00> : vector<8x8xf32>
    %9 = vector.multi_reduction <add>, %8, %cst_3 [2] : vector<8x8x128xf32> to vector<8x8xf32>
    %10 = vector.shape_cast %9 : vector<8x8xf32> to vector<8x8x1xf32>
    %cst_4 = arith.constant 1.000000e-24 : f32
    %11 = vector.broadcast %cst_4 : f32 to vector<8x8x1xf32>
    %12 = arith.maximumf %10, %11 : vector<8x8x1xf32>
    %13 = math.rsqrt %12 : vector<8x8x1xf32>
    %14 = vector.broadcast %13 : vector<8x8x1xf32> to vector<8x8x128xf32>
    %15 = arith.mulf %7, %14 : vector<8x8x128xf32>
    %16 = arith.truncf %15 : vector<8x8x128xf32> to vector<8x8x128xbf16>
    %c0_5 = arith.constant 0 : index
    %c0_6 = arith.constant 0 : index
    %c0_7 = arith.constant 0 : index
    %17 = vector.load %arg3[%c0_5, %c0_6, %c0_7] : memref<8x8x8xbf16, #tpu.memory_space<vmem>>, vector<8x8x8xbf16>
    %cst_8 = arith.constant dense<0.000000e+00> : vector<8x8x128xf32>
    %18 = tpu.matmul %17, %16, %cst_8 {dimension_numbers = #tpu.dot_dimension_numbers<[2], [1], [1], [2], [0, 0, 0, 1, 1, 2], [0], [0]>} : vector<8x8x8xbf16>, vector<8x8x128xbf16>, vector<8x8x128xf32> -> vector<8x8x128xf32>
    %19 = arith.truncf %18 : vector<8x8x128xf32> to vector<8x8x128xbf16>
    %cst_9 = arith.constant dense<0.000000e+00> : vector<8x8x8xf32>
    %20 = tpu.matmul %19, %16, %cst_9 {dimension_numbers = #tpu.dot_dimension_numbers<[2], [2], [1], [1], [0, 0, 0, 1, 1, 1], [0], [0]>} : vector<8x8x128xbf16>, vector<8x8x128xbf16>, vector<8x8x8xf32> -> vector<8x8x8xf32>
    %21 = math.absf %20 : vector<8x8x8xf32>
    %cst_10 = arith.constant dense<0.000000e+00> : vector<8x8xf32>
    %22 = vector.multi_reduction <add>, %21, %cst_10 [2] : vector<8x8x8xf32> to vector<8x8xf32>
    %cst_11 = arith.constant dense<0.000000e+00> : vector<8xf32>
    %23 = vector.multi_reduction <add>, %22, %cst_11 [1] : vector<8x8xf32> to vector<8xf32>
    %24 = vector.shape_cast %23 : vector<8xf32> to vector<8x1xf32>
    %cst_12 = arith.constant 7.812500e-03 : f32
    %25 = vector.broadcast %cst_12 : f32 to vector<8x1xf32>
    %26 = arith.mulf %24, %25 : vector<8x1xf32>
    %c0_13 = arith.constant 0 : index
    %c0_14 = arith.constant 0 : index
    %27 = vector.load %arg4[%c0_13, %c0_14] : memref<8x1xf32, #tpu.memory_space<vmem>>, vector<8x1xf32>
    tpu.vector_store %arg4[%c0_13, %c0_14], %26 {strides = array<i32>} : memref<8x1xf32, #tpu.memory_space<vmem>>, vector<8x1xf32>,
    return
  }
  func.func @transform_0(%arg0: i32) -> (i32, i32) {
    %c0_i32 = arith.constant 0 : i32
    %c0_i32_0 = arith.constant 0 : i32
    %c0_i32_1 = arith.constant 0 : i32
    return %c0_i32, %c0_i32_0 : i32, i32
  }
  func.func @transform_1(%arg0: i32) -> (i32, i32) {
    %c0_i32 = arith.constant 0 : i32
    %c0_i32_0 = arith.constant 0 : i32
    return %arg0, %c0_i32 : i32, i32
  }
  func.func @transform_2(%arg0: i32) -> (i32, i32, i32) {
    %c0_i32 = arith.constant 0 : i32
    %c0_i32_0 = arith.constant 0 : i32
    %c0_i32_1 = arith.constant 0 : i32
    return %arg0, %c0_i32, %c0_i32_0 : i32, i32, i32
  }
  func.func @transform_3(%arg0: i32) -> (i32, i32) {
    %c0_i32 = arith.constant 0 : i32
    %c0_i32_0 = arith.constant 0 : i32
    return %arg0, %c0_i32 : i32, i32
  }
}

</mosaic_0001>

<llo_original>
// kernel: tpu_custom_call.1
$region0: #{tpu_custom_call.1}
  #allocation0 [shape = 'u32[]', space=smem, size = 0x4, offset = 0x4, fixed_abs, tag = 'smem constant byte address 0x4 - core index']
  #allocation1 [shape = 'u32[144,128]{1,0:T(1,128)}', space=vmem, size = 0x12000, scoped, tag = 'internal scratch']
  %s0 = inlined_call_operand.hbm [shape: f32[8,128], index: 0, kind: input, shape index: {}]
  %s1 = inlined_call_operand.hbm [shape: f32[8,8], index: 1, kind: input, shape index: {}]
  %s2 = inlined_call_operand.hbm [shape: bf16[8,8,8], index: 2, kind: input, shape index: {}]
  %s3 = inlined_call_operand.vmem [shape: f32[8,1], index: 3, kind: output, shape index: {}]
  %s4 = sld [smem:[#allocation0]]
  $region34: #{tpu_custom_call.1} parent=0
    _
  %s6 = ssub.s32 1, %s4
  %s7 = scalar_select 0, %s6, %s4
  $region1: #{tpu_custom_call.1} parent=0
    #allocation2 [shape = 'u8[4096]{0}', space=vmem, size = 0x1000, scoped, tag = 'input window, operand 0, single buffered']
    #allocation3 [shape = 's32[1]{0}', space=sflag, size = 0x4, scoped, tag = 'scoped memory for tpu_custom_call.1']
    #allocation4 [shape = 'u8[4096]{0}', space=vmem, size = 0x1000, scoped, tag = 'input window, operand 1, single buffered']
    #allocation5 [shape = 's32[1]{0}', space=sflag, size = 0x4, scoped, tag = 'scoped memory for tpu_custom_call.1']
    #allocation6 [shape = 'u8[16384]{0}', space=vmem, size = 0x4000, scoped, tag = 'input window, operand 2, single buffered']
    %8 = vsyncpa [#allocation3], 0
    %9 = vsyncpa [#allocation5], 0
    // Predicated region
    $region2: #{tpu_custom_call.1} parent=1 // pred_check
      _
    $region3: #{tpu_custom_call.1} parent=1 // pred_check_branch
      %11 = sbr.rel (0) target = $region5
    $region4: #{tpu_custom_call.1} parent=1 // pred_region
      %s13 = ssub.s32 128, 128
      %14 = vsyncadd [#allocation3], %s13
      %s16 = sshll.u32 [#allocation2], 4
      %s17 = int_to_ptr.vmem [resolvable:$true] %s16
      %19 = dma.hbm_to_vmem [thread:$0]  %s0, 128, %s17, [#allocation3]
    $region5: #{tpu_custom_call.1} parent=1 // pred_fallthru
      _
    // Predicated region
    $region6: #{tpu_custom_call.1} parent=1 // pred_check
      _
    $region7: #{tpu_custom_call.1} parent=1 // pred_check_branch
      %21 = sbr.rel (0) target = $region9
    $region8: #{tpu_custom_call.1} parent=1 // pred_region
      %s23 = ssub.s32 128, 128
      %24 = vsyncadd [#allocation5], %s23
      %s26 = sshll.u32 [#allocation4], 4
      %s27 = int_to_ptr.vmem [resolvable:$true] %s26
      %29 = dma.hbm_to_vmem [thread:$0]  %s1, 128, %s27, [#allocation5]
    $region9: #{tpu_custom_call.1} parent=1 // pred_fallthru
      _
    // Predicated region
    $region10: #{tpu_custom_call.1} parent=1 // pred_check
      _
    $region11: #{tpu_custom_call.1} parent=1 // pred_check_branch
      %31 = sbr.rel (0) target = $region13
    $region12: #{tpu_custom_call.1} parent=1 // pred_region
      %s33 = ssub.s32 512, 512
      %34 = vsyncadd [#allocation5], %s33
      %s35 = sshll.u32 [#allocation6], 4
      %s36 = int_to_ptr.vmem [resolvable:$true] %s35
      %41 = dma.hbm_to_vmem [thread:$0]  %s2, 512, %s36, [#allocation5], 64, 64, 4
    $region13: #{tpu_custom_call.1} parent=1 // pred_fallthru
      _
    // Predicated region
    $region14: #{tpu_custom_call.1} parent=1 // pred_check
      _
    $region15: #{tpu_custom_call.1} parent=1 // pred_check_branch
      %43 = sbr.rel (0) target = $region17
    $region16: #{tpu_custom_call.1} parent=1 // pred_region
      %44 = dma.done [#allocation3], 128
    $region17: #{tpu_custom_call.1} parent=1 // pred_fallthru
      _
    // Predicated region
    $region18: #{tpu_custom_call.1} parent=1 // pred_check
      _
    $region19: #{tpu_custom_call.1} parent=1 // pred_check_branch
      %46 = sbr.rel (0) target = $region21
    $region20: #{tpu_custom_call.1} parent=1 // pred_region
      %47 = dma.done [#allocation5], 128
    $region21: #{tpu_custom_call.1} parent=1 // pred_fallthru
      _
    // Predicated region
    $region22: #{tpu_custom_call.1} parent=1 // pred_check
      _
    $region23: #{tpu_custom_call.1} parent=1 // pred_check_branch
      %49 = sbr.rel (0) target = $region25
    $region24: #{tpu_custom_call.1} parent=1 // pred_region
      %50 = dma.done [#allocation5], 512
    $region25: #{tpu_custom_call.1} parent=1 // pred_fallthru
      _
    %v52 = vld [vmem:[#allocation2] sm:$0xff]
    %v53 = vld [vmem:[#allocation4] sm:$0xff]
    %vm54 = vcmask 64512
    %v56 = vsel %vm54, %v53, 0
    %58 = vmatprep.subr.mxu0 0.0
    %59 = vmatpush1.msra.mxu0 %v52
    %60 = vmatprep.subr.mxu0 0.0
    %61 = vmatpush1.msra.mxu0 0.0
    %62 = vmatprep.subr.mxu0 0.0
    %63 = vmatpush1.msra.mxu0 0.0
    %64 = vmatprep.subr.mxu0 0.0
    %65 = vmatpush1.msra.mxu0 0.0
    %66 = vmatprep.subr.mxu0 0.0
    %67 = vmatpush1.msra.mxu0 0.0
    %68 = vmatprep.subr.mxu0 0.0
    %69 = vmatpush1.msra.mxu0 0.0
    %70 = vmatprep.subr.mxu0 0.0
    %71 = vmatpush1.msra.mxu0 0.0
    %72 = vmatprep.subr.mxu0 0.0
    %73 = vmatpush1.msra.mxu0 0.0
    %74 = vmatprep.subr.mxu0 0.0
    %75 = vmatpush1.msra.mxu0 0.0
    %76 = vmatprep.subr.mxu0 0.0
    %77 = vmatpush1.msra.mxu0 0.0
    %78 = vmatprep.subr.mxu0 0.0
    %79 = vmatpush1.msra.mxu0 0.0
    %80 = vmatprep.subr.mxu0 0.0
    %81 = vmatpush1.msra.mxu0 0.0
    %82 = vmatprep.subr.mxu0 0.0
    %83 = vmatpush1.msra.mxu0 0.0
    %84 = vmatprep.subr.mxu0 0.0
    %85 = vmatpush1.msra.mxu0 0.0
    %86 = vmatprep.subr.mxu0 0.0
    %87 = vmatpush1.msra.mxu0 0.0
    %88 = vmatprep.subr.mxu0 0.0
    %89 = vmatpush1.msra.mxu0 0.0
    %90 = vmatprep.subr.mxu0 0.0
    %91 = vmatpush1.msra.mxu0 0.0
    %92 = vmatprep.subr.mxu0 0.0
    %93 = vmatpush1.msra.mxu0 0.0
    %94 = vmatprep.subr.mxu0 0.0
    %95 = vmatpush1.msra.mxu0 0.0
    %96 = vmatprep.subr.mxu0 0.0
    %97 = vmatpush1.msra.mxu0 0.0
    %98 = vmatprep.subr.mxu0 0.0
    %99 = vmatpush1.msra.mxu0 0.0
    %100 = vmatprep.subr.mxu0 0.0
    %101 = vmatpush1.msra.mxu0 0.0
    %102 = vmatprep.subr.mxu0 0.0
    %103 = vmatpush1.msra.mxu0 0.0
    %104 = vmatprep.subr.mxu0 0.0
    %105 = vmatpush1.msra.mxu0 0.0
    %106 = vmatprep.subr.mxu0 0.0
    %107 = vmatpush1.msra.mxu0 0.0
    %108 = vmatprep.subr.mxu0 0.0
    %109 = vmatpush1.msra.mxu0 0.0
    %110 = vmatprep.subr.mxu0 0.0
    %111 = vmatpush1.msra.mxu0 0.0
    %112 = vmatprep.subr.mxu0 0.0
    %113 = vmatpush1.msra.mxu0 0.0
    %114 = vmatprep.subr.mxu0 0.0
    %115 = vmatpush1.msra.mxu0 0.0
    %116 = vmatprep.subr.mxu0 0.0
    %117 = vmatpush1.msra.mxu0 0.0
    %118 = vmatprep.subr.mxu0 0.0
    %119 = vmatpush1.msra.mxu0 0.0
    %120 = vmatprep.subr.mxu0 0.0
    %121 = vmatpush1.msra.mxu0 0.0
    %122 = vmatprep.mubr.f32.mxu0 0.0
    %123 = vmatmul.mubr.f32.gmra.mrb[0].mxu0 %v56
    %v124 = vpop.f32.mrb[0].mxu0
    %v125 = vadd.f32 0.0, %v124
    %v126 = vpop.f32.mrb[0].mxu0
    %127 = vdwg.mxu0
    %v129 = vcombine.high %v125, %v125
    %v131 = vunpack.c.l.s4 1966171168
    %v132 = vunpack.c.0.s8 %v131
    %v133 = vlaneseq
    %v134 = vshrl.u32 %v133, 7
    %v135 = vsub.s32 %v132, %v134
    %v136 = vrot.slane %v125, %v135
    %v138 = vunpack.c.l.s4 1966171168
    %v139 = vunpack.c.0.s8 %v138
    %v140 = vlaneseq
    %v141 = vshrl.u32 %v140, 7
    %v142 = vsub.s32 %v139, %v141
    %v143 = vrot.slane %v129, %v142
    %v144 = vcombine.high %v136, %v136
    %v145 = vcombine.high %v143, %v143
    %v147 = vunpack.c.l.s4 1966171168
    %v148 = vunpack.c.0.s8 %v147
    %v149 = vlaneseq
    %v150 = vshrl.u32 %v149, 7
    %v151 = vsub.s32 %v148, %v150
    %v152 = vrot.slane %v136, %v151
    %v154 = vunpack.c.l.s4 1966171168
    %v155 = vunpack.c.0.s8 %v154
    %v156 = vlaneseq
    %v157 = vshrl.u32 %v156, 7
    %v158 = vsub.s32 %v155, %v157
    %v159 = vrot.slane %v143, %v158
    %v161 = vunpack.c.l.s4 1966171168
    %v162 = vunpack.c.0.s8 %v161
    %v163 = vlaneseq
    %v164 = vshrl.u32 %v163, 7
    %v165 = vsub.s32 %v162, %v164
    %v166 = vrot.slane %v144, %v165
    %v168 = vunpack.c.l.s4 1966171168
    %v169 = vunpack.c.0.s8 %v168
    %v170 = vlaneseq
    %v171 = vshrl.u32 %v170, 7
    %v172 = vsub.s32 %v169, %v171
    %v173 = vrot.slane %v145, %v172
    %v174 = vcombine.high %v152, %v152
    %v175 = vcombine.high %v159, %v159
    %v176 = vcombine.high %v166, %v166
    %v177 = vcombine.high %v173, %v173
    %v178 = vlaneseq
    %v179 = vshrl.u32 %v178, 7
    %v180 = vsub.s32 0, %v179
    %v181 = vrot.slane %v152, %v180
    %v182 = vlaneseq
    %v183 = vshrl.u32 %v182, 7
    %v184 = vsub.s32 0, %v183
    %v185 = vrot.slane %v166, %v184
    %v186 = vlaneseq
    %v187 = vshrl.u32 %v186, 7
    %v188 = vsub.s32 0, %v187
    %v189 = vrot.slane %v174, %v188
    %v190 = vlaneseq
    %v191 = vshrl.u32 %v190, 7
    %v192 = vsub.s32 0, %v191
    %v193 = vrot.slane %v176, %v192
    %v194 = vlaneseq
    %v195 = vshrl.u32 %v194, 7
    %v196 = vsub.s32 0, %v195
    %v197 = vrot.slane %v159, %v196
    %v198 = vlaneseq
    %v199 = vshrl.u32 %v198, 7
    %v200 = vsub.s32 0, %v199
    %v201 = vrot.slane %v173, %v200
    %v202 = vlaneseq
    %v203 = vshrl.u32 %v202, 7
    %v204 = vsub.s32 0, %v203
    %v205 = vrot.slane %v175, %v204
    %v206 = vlaneseq
    %v207 = vshrl.u32 %v206, 7
    %v208 = vsub.s32 0, %v207
    %v209 = vrot.slane %v177, %v208
    %v218 = vsub.f32 %v52, %v181
    %v219 = vsub.f32 %v52, %v185
    %v220 = vsub.f32 %v52, %v189
    %v221 = vsub.f32 %v52, %v193
    %v222 = vsub.f32 %v52, %v197
    %v223 = vsub.f32 %v52, %v201
    %v224 = vsub.f32 %v52, %v205
    %v225 = vsub.f32 %v52, %v209
    %v226 = vmul.f32 %v218, %v218
    %v227 = vmul.f32 %v219, %v219
    %v228 = vmul.f32 %v220, %v220
    %v229 = vmul.f32 %v221, %v221
    %v230 = vmul.f32 %v222, %v222
    %v231 = vmul.f32 %v223, %v223
    %v232 = vmul.f32 %v224, %v224
    %v233 = vmul.f32 %v225, %v225
    %234 = vadd.xlane.f32.xlu0 %v226
    %v235 = vpop.xlane.xlu0 %234
    %236 = vadd.xlane.f32.xlu0 %v227
    %v237 = vpop.xlane.xlu0 %236
    %238 = vadd.xlane.f32.xlu0 %v228
    %v239 = vpop.xlane.xlu0 %238
    %240 = vadd.xlane.f32.xlu0 %v229
    %v241 = vpop.xlane.xlu0 %240
    %242 = vadd.xlane.f32.xlu0 %v230
    %v243 = vpop.xlane.xlu0 %242
    %244 = vadd.xlane.f32.xlu0 %v231
    %v245 = vpop.xlane.xlu0 %244
    %246 = vadd.xlane.f32.xlu0 %v232
    %v247 = vpop.xlane.xlu0 %246
    %248 = vadd.xlane.f32.xlu0 %v233
    %v249 = vpop.xlane.xlu0 %248
    %v250 = vmax.f32 %v235, 1e-24
    %v251 = vmax.f32 %v237, 1e-24
    %v252 = vmax.f32 %v239, 1e-24
    %v253 = vmax.f32 %v241, 1e-24
    %v254 = vmax.f32 %v243, 1e-24
    %v255 = vmax.f32 %v245, 1e-24
    %v256 = vmax.f32 %v247, 1e-24
    %v257 = vmax.f32 %v249, 1e-24
    %v258 = vrsqrt.pop %v250
    %v259 = vrsqrt.pop %v251
    %v260 = vrsqrt.pop %v252
    %v261 = vrsqrt.pop %v253
    %v262 = vrsqrt.pop %v254
    %v263 = vrsqrt.pop %v255
    %v264 = vrsqrt.pop %v256
    %v265 = vrsqrt.pop %v257
    %v266 = vmul.f32 %v218, %v258
    %v267 = vmul.f32 %v219, %v259
    %v268 = vmul.f32 %v220, %v260
    %v269 = vmul.f32 %v221, %v261
    %v270 = vmul.f32 %v222, %v262
    %v271 = vmul.f32 %v223, %v263
    %v272 = vmul.f32 %v224, %v264
    %v273 = vmul.f32 %v225, %v265
    %v274 = vpack.c.bf16 %v266, %v266
    %v275 = vpack.c.bf16 %v267, %v267
    %v276 = vpack.c.bf16 %v268, %v268
    %v277 = vpack.c.bf16 %v269, %v269
    %v278 = vpack.c.bf16 %v270, %v270
    %v279 = vpack.c.bf16 %v271, %v271
    %v280 = vpack.c.bf16 %v272, %v272
    %v281 = vpack.c.bf16 %v273, %v273
    %v282 = vld [vmem:[#allocation6] sm:$0xf]
    %v283 = vld [vmem:[#allocation6 + $0x4] sm:$0xf]
    %v284 = vld [vmem:[#allocation6 + $0x8] sm:$0xf]
    %v285 = vld [vmem:[#allocation6 + $0xc] sm:$0xf]
    %v286 = vld [vmem:[#allocation6 + $0x10] sm:$0xf]
    %v287 = vld [vmem:[#allocation6 + $0x14] sm:$0xf]
    %v288 = vld [vmem:[#allocation6 + $0x18] sm:$0xf]
    %v289 = vld [vmem:[#allocation6 + $0x1c] sm:$0xf]
    %v291 = vsel %vm54, %v282, 0
    %vm293 = vcmask 1043456
    %v295 = vsel %vm293, %v274, 0
    %297 = vmatprep.subr.bf16.mxu0 0
    %298 = vmatpush1.bf16.msra.mxu0 %v295
    %299 = vmatprep.subr.bf16.mxu0 0
    %300 = vmatpush1.bf16.msra.mxu0 0
    %301 = vmatprep.subr.bf16.mxu0 0
    %302 = vmatpush1.bf16.msra.mxu0 0
    %303 = vmatprep.subr.bf16.mxu0 0
    %304 = vmatpush1.bf16.msra.mxu0 0
    %305 = vmatprep.subr.bf16.mxu0 0
    %306 = vmatpush1.bf16.msra.mxu0 0
    %307 = vmatprep.subr.bf16.mxu0 0
    %308 = vmatpush1.bf16.msra.mxu0 0
    %309 = vmatprep.subr.bf16.mxu0 0
    %310 = vmatpush1.bf16.msra.mxu0 0
    %311 = vmatprep.subr.bf16.mxu0 0
    %312 = vmatpush1.bf16.msra.mxu0 0
    %313 = vmatprep.subr.bf16.mxu0 0
    %314 = vmatpush1.bf16.msra.mxu0 0
    %315 = vmatprep.subr.bf16.mxu0 0
    %316 = vmatpush1.bf16.msra.mxu0 0
    %317 = vmatprep.subr.bf16.mxu0 0
    %318 = vmatpush1.bf16.msra.mxu0 0
    %319 = vmatprep.subr.bf16.mxu0 0
    %320 = vmatpush1.bf16.msra.mxu0 0
    %321 = vmatprep.subr.bf16.mxu0 0
    %322 = vmatpush1.bf16.msra.mxu0 0
    %323 = vmatprep.subr.bf16.mxu0 0
    %324 = vmatpush1.bf16.msra.mxu0 0
    %325 = vmatprep.subr.bf16.mxu0 0
    %326 = vmatpush1.bf16.msra.mxu0 0
    %327 = vmatprep.subr.bf16.mxu0 0
    %328 = vmatpush1.bf16.msra.mxu0 0
    %329 = vmatprep.mubr.bf16.mxu0 0
    %330 = vmatmul.mubr.bf16.gmra.mrb[0].mxu0 %v291
    %v331 = vpop.f32.mrb[0].mxu0
    %v332 = vadd.f32 0.0, %v331
    %v333 = vpop.f32.mrb[0].mxu0
    %v334 = vpop.f32.mrb[0].mxu0
    %v335 = vpop.f32.mrb[0].mxu0
    %336 = vdwg.mxu0
    %v338 = vsel %vm54, %v283, 0
    %v341 = vsel %vm293, %v275, 0
    %343 = vmatprep.subr.bf16.mxu0 0
    %344 = vmatpush1.bf16.msra.mxu0 %v341
    %345 = vmatprep.subr.bf16.mxu0 0
    %346 = vmatpush1.bf16.msra.mxu0 0
    %347 = vmatprep.subr.bf16.mxu0 0
    %348 = vmatpush1.bf16.msra.mxu0 0
    %349 = vmatprep.subr.bf16.mxu0 0
    %350 = vmatpush1.bf16.msra.mxu0 0
    %351 = vmatprep.subr.bf16.mxu0 0
    %352 = vmatpush1.bf16.msra.mxu0 0
    %353 = vmatprep.subr.bf16.mxu0 0
    %354 = vmatpush1.bf16.msra.mxu0 0
    %355 = vmatprep.subr.bf16.mxu0 0
    %356 = vmatpush1.bf16.msra.mxu0 0
    %357 = vmatprep.subr.bf16.mxu0 0
    %358 = vmatpush1.bf16.msra.mxu0 0
    %359 = vmatprep.subr.bf16.mxu0 0
    %360 = vmatpush1.bf16.msra.mxu0 0
    %361 = vmatprep.subr.bf16.mxu0 0
    %362 = vmatpush1.bf16.msra.mxu0 0
    %363 = vmatprep.subr.bf16.mxu0 0
    %364 = vmatpush1.bf16.msra.mxu0 0
    %365 = vmatprep.subr.bf16.mxu0 0
    %366 = vmatpush1.bf16.msra.mxu0 0
    %367 = vmatprep.subr.bf16.mxu0 0
    %368 = vmatpush1.bf16.msra.mxu0 0
    %369 = vmatprep.subr.bf16.mxu0 0
    %370 = vmatpush1.bf16.msra.mxu0 0
    %371 = vmatprep.subr.bf16.mxu0 0
    %372 = vmatpush1.bf16.msra.mxu0 0
    %373 = vmatprep.subr.bf16.mxu0 0
    %374 = vmatpush1.bf16.msra.mxu0 0
    %375 = vmatprep.mubr.bf16.mxu0 0
    %376 = vmatmul.mubr.bf16.gmra.mrb[0].mxu0 %v338
    %v377 = vpop.f32.mrb[0].mxu0
    %v378 = vadd.f32 0.0, %v377
    %v379 = vpop.f32.mrb[0].mxu0
    %v380 = vpop.f32.mrb[0].mxu0
    %v381 = vpop.f32.mrb[0].mxu0
    %382 = vdwg.mxu0
    %v384 = vsel %vm54, %v284, 0
    %v387 = vsel %vm293, %v276, 0
    %389 = vmatprep.subr.bf16.mxu0 0
    %390 = vmatpush1.bf16.msra.mxu0 %v387
    %391 = vmatprep.subr.bf16.mxu0 0
    %392 = vmatpush1.bf16.msra.mxu0 0
    %393 = vmatprep.subr.bf16.mxu0 0
    %394 = vmatpush1.bf16.msra.mxu0 0
    %395 = vmatprep.subr.bf16.mxu0 0
    %396 = vmatpush1.bf16.msra.mxu0 0
    %397 = vmatprep.subr.bf16.mxu0 0
    %398 = vmatpush1.bf16.msra.mxu0 0
    %399 = vmatprep.subr.bf16.mxu0 0
    %400 = vmatpush1.bf16.msra.mxu0 0
    %401 = vmatprep.subr.bf16.mxu0 0
    %402 = vmatpush1.bf16.msra.mxu0 0
    %403 = vmatprep.subr.bf16.mxu0 0
    %404 = vmatpush1.bf16.msra.mxu0 0
    %405 = vmatprep.subr.bf16.mxu0 0
    %406 = vmatpush1.bf16.msra.mxu0 0
    %407 = vmatprep.subr.bf16.mxu0 0
    %408 = vmatpush1.bf16.msra.mxu0 0
    %409 = vmatprep.subr.bf16.mxu0 0
    %410 = vmatpush1.bf16.msra.mxu0 0
    %411 = vmatprep.subr.bf16.mxu0 0
    %412 = vmatpush1.bf16.msra.mxu0 0
    %413 = vmatprep.subr.bf16.mxu0 0
    %414 = vmatpush1.bf16.msra.mxu0 0
    %415 = vmatprep.subr.bf16.mxu0 0
    %416 = vmatpush1.bf16.msra.mxu0 0
    %417 = vmatprep.subr.bf16.mxu0 0
    %418 = vmatpush1.bf16.msra.mxu0 0
    %419 = vmatprep.subr.bf16.mxu0 0
    %420 = vmatpush1.bf16.msra.mxu0 0
    %421 = vmatprep.mubr.bf16.mxu0 0
    %422 = vmatmul.mubr.bf16.gmra.mrb[0].mxu0 %v384
    %v423 = vpop.f32.mrb[0].mxu0
    %v424 = vadd.f32 0.0, %v423
    %v425 = vpop.f32.mrb[0].mxu0
    %v426 = vpop.f32.mrb[0].mxu0
    %v427 = vpop.f32.mrb[0].mxu0
    %428 = vdwg.mxu0
    %v430 = vsel %vm54, %v285, 0
    %v433 = vsel %vm293, %v277, 0
    %435 = vmatprep.subr.bf16.mxu0 0
    %436 = vmatpush1.bf16.msra.mxu0 %v433
    %437 = vmatprep.subr.bf16.mxu0 0
    %438 = vmatpush1.bf16.msra.mxu0 0
    %439 = vmatprep.subr.bf16.mxu0 0
    %440 = vmatpush1.bf16.msra.mxu0 0
    %441 = vmatprep.subr.bf16.mxu0 0
    %442 = vmatpush1.bf16.msra.mxu0 0
    %443 = vmatprep.subr.bf16.mxu0 0
    %444 = vmatpush1.bf16.msra.mxu0 0
    %445 = vmatprep.subr.bf16.mxu0 0
    %446 = vmatpush1.bf16.msra.mxu0 0
    %447 = vmatprep.subr.bf16.mxu0 0
    %448 = vmatpush1.bf16.msra.mxu0 0
    %449 = vmatprep.subr.bf16.mxu0 0
    %450 = vmatpush1.bf16.msra.mxu0 0
    %451 = vmatprep.subr.bf16.mxu0 0
    %452 = vmatpush1.bf16.msra.mxu0 0
    %453 = vmatprep.subr.bf16.mxu0 0
    %454 = vmatpush1.bf16.msra.mxu0 0
    %455 = vmatprep.subr.bf16.mxu0 0
    %456 = vmatpush1.bf16.msra.mxu0 0
    %457 = vmatprep.subr.bf16.mxu0 0
    %458 = vmatpush1.bf16.msra.mxu0 0
    %459 = vmatprep.subr.bf16.mxu0 0
    %460 = vmatpush1.bf16.msra.mxu0 0
    %461 = vmatprep.subr.bf16.mxu0 0
    %462 = vmatpush1.bf16.msra.mxu0 0
    %463 = vmatprep.subr.bf16.mxu0 0
    %464 = vmatpush1.bf16.msra.mxu0 0
    %465 = vmatprep.subr.bf16.mxu0 0
    %466 = vmatpush1.bf16.msra.mxu0 0
    %467 = vmatprep.mubr.bf16.mxu0 0
    %468 = vmatmul.mubr.bf16.gmra.mrb[0].mxu0 %v430
    %v469 = vpop.f32.mrb[0].mxu0
    %v470 = vadd.f32 0.0, %v469
    %v471 = vpop.f32.mrb[0].mxu0
    %v472 = vpop.f32.mrb[0].mxu0
    %v473 = vpop.f32.mrb[0].mxu0
    %474 = vdwg.mxu0
    %v476 = vsel %vm54, %v286, 0
    %v479 = vsel %vm293, %v278, 0
    %481 = vmatprep.subr.bf16.mxu0 0
    %482 = vmatpush1.bf16.msra.mxu0 %v479
    %483 = vmatprep.subr.bf16.mxu0 0
    %484 = vmatpush1.bf16.msra.mxu0 0
    %485 = vmatprep.subr.bf16.mxu0 0
    %486 = vmatpush1.bf16.msra.mxu0 0
    %487 = vmatprep.subr.bf16.mxu0 0
    %488 = vmatpush1.bf16.msra.mxu0 0
    %489 = vmatprep.subr.bf16.mxu0 0
    %490 = vmatpush1.bf16.msra.mxu0 0
    %491 = vmatprep.subr.bf16.mxu0 0
    %492 = vmatpush1.bf16.msra.mxu0 0
    %493 = vmatprep.subr.bf16.mxu0 0
    %494 = vmatpush1.bf16.msra.mxu0 0
    %495 = vmatprep.subr.bf16.mxu0 0
    %496 = vmatpush1.bf16.msra.mxu0 0
    %497 = vmatprep.subr.bf16.mxu0 0
    %498 = vmatpush1.bf16.msra.mxu0 0
    %499 = vmatprep.subr.bf16.mxu0 0
    %500 = vmatpush1.bf16.msra.mxu0 0
    %501 = vmatprep.subr.bf16.mxu0 0
    %502 = vmatpush1.bf16.msra.mxu0 0
    %503 = vmatprep.subr.bf16.mxu0 0
    %504 = vmatpush1.bf16.msra.mxu0 0
    %505 = vmatprep.subr.bf16.mxu0 0
    %506 = vmatpush1.bf16.msra.mxu0 0
    %507 = vmatprep.subr.bf16.mxu0 0
    %508 = vmatpush1.bf16.msra.mxu0 0
    %509 = vmatprep.subr.bf16.mxu0 0
    %510 = vmatpush1.bf16.msra.mxu0 0
    %511 = vmatprep.subr.bf16.mxu0 0
    %512 = vmatpush1.bf16.msra.mxu0 0
    %513 = vmatprep.mubr.bf16.mxu0 0
    %514 = vmatmul.mubr.bf16.gmra.mrb[0].mxu0 %v476
    %v515 = vpop.f32.mrb[0].mxu0
    %v516 = vadd.f32 0.0, %v515
    %v517 = vpop.f32.mrb[0].mxu0
    %v518 = vpop.f32.mrb[0].mxu0
    %v519 = vpop.f32.mrb[0].mxu0
    %520 = vdwg.mxu0
    %v522 = vsel %vm54, %v287, 0
    %v525 = vsel %vm293, %v279, 0
    %527 = vmatprep.subr.bf16.mxu0 0
    %528 = vmatpush1.bf16.msra.mxu0 %v525
    %529 = vmatprep.subr.bf16.mxu0 0
    %530 = vmatpush1.bf16.msra.mxu0 0
    %531 = vmatprep.subr.bf16.mxu0 0
    %532 = vmatpush1.bf16.msra.mxu0 0
    %533 = vmatprep.subr.bf16.mxu0 0
    %534 = vmatpush1.bf16.msra.mxu0 0
    %535 = vmatprep.subr.bf16.mxu0 0
    %536 = vmatpush1.bf16.msra.mxu0 0
    %537 = vmatprep.subr.bf16.mxu0 0
    %538 = vmatpush1.bf16.msra.mxu0 0
    %539 = vmatprep.subr.bf16.mxu0 0
    %540 = vmatpush1.bf16.msra.mxu0 0
    %541 = vmatprep.subr.bf16.mxu0 0
    %542 = vmatpush1.bf16.msra.mxu0 0
    %543 = vmatprep.subr.bf16.mxu0 0
    %544 = vmatpush1.bf16.msra.mxu0 0
    %545 = vmatprep.subr.bf16.mxu0 0
    %546 = vmatpush1.bf16.msra.mxu0 0
    %547 = vmatprep.subr.bf16.mxu0 0
    %548 = vmatpush1.bf16.msra.mxu0 0
    %549 = vmatprep.subr.bf16.mxu0 0
    %550 = vmatpush1.bf16.msra.mxu0 0
    %551 = vmatprep.subr.bf16.mxu0 0
    %552 = vmatpush1.bf16.msra.mxu0 0
    %553 = vmatprep.subr.bf16.mxu0 0
    %554 = vmatpush1.bf16.msra.mxu0 0
    %555 = vmatprep.subr.bf16.mxu0 0
    %556 = vmatpush1.bf16.msra.mxu0 0
    %557 = vmatprep.subr.bf16.mxu0 0
    %558 = vmatpush1.bf16.msra.mxu0 0
    %559 = vmatprep.mubr.bf16.mxu0 0
    %560 = vmatmul.mubr.bf16.gmra.mrb[0].mxu0 %v522
    %v561 = vpop.f32.mrb[0].mxu0
    %v562 = vadd.f32 0.0, %v561
    %v563 = vpop.f32.mrb[0].mxu0
    %v564 = vpop.f32.mrb[0].mxu0
    %v565 = vpop.f32.mrb[0].mxu0
    %566 = vdwg.mxu0
    %v568 = vsel %vm54, %v288, 0
    %v571 = vsel %vm293, %v280, 0
    %573 = vmatprep.subr.bf16.mxu0 0
    %574 = vmatpush1.bf16.msra.mxu0 %v571
    %575 = vmatprep.subr.bf16.mxu0 0
    %576 = vmatpush1.bf16.msra.mxu0 0
    %577 = vmatprep.subr.bf16.mxu0 0
    %578 = vmatpush1.bf16.msra.mxu0 0
    %579 = vmatprep.subr.bf16.mxu0 0
    %580 = vmatpush1.bf16.msra.mxu0 0
    %581 = vmatprep.subr.bf16.mxu0 0
    %582 = vmatpush1.bf16.msra.mxu0 0
    %583 = vmatprep.subr.bf16.mxu0 0
    %584 = vmatpush1.bf16.msra.mxu0 0
    %585 = vmatprep.subr.bf16.mxu0 0
    %586 = vmatpush1.bf16.msra.mxu0 0
    %587 = vmatprep.subr.bf16.mxu0 0
    %588 = vmatpush1.bf16.msra.mxu0 0
    %589 = vmatprep.subr.bf16.mxu0 0
    %590 = vmatpush1.bf16.msra.mxu0 0
    %591 = vmatprep.subr.bf16.mxu0 0
    %592 = vmatpush1.bf16.msra.mxu0 0
    %593 = vmatprep.subr.bf16.mxu0 0
    %594 = vmatpush1.bf16.msra.mxu0 0
    %595 = vmatprep.subr.bf16.mxu0 0
    %596 = vmatpush1.bf16.msra.mxu0 0
    %597 = vmatprep.subr.bf16.mxu0 0
    %598 = vmatpush1.bf16.msra.mxu0 0
    %599 = vmatprep.subr.bf16.mxu0 0
    %600 = vmatpush1.bf16.msra.mxu0 0
    %601 = vmatprep.subr.bf16.mxu0 0
    %602 = vmatpush1.bf16.msra.mxu0 0
    %603 = vmatprep.subr.bf16.mxu0 0
    %604 = vmatpush1.bf16.msra.mxu0 0
    %605 = vmatprep.mubr.bf16.mxu0 0
    %606 = vmatmul.mubr.bf16.gmra.mrb[0].mxu0 %v568
    %v607 = vpop.f32.mrb[0].mxu0
    %v608 = vadd.f32 0.0, %v607
    %v609 = vpop.f32.mrb[0].mxu0
    %v610 = vpop.f32.mrb[0].mxu0
    %v611 = vpop.f32.mrb[0].mxu0
    %612 = vdwg.mxu0
    %v614 = vsel %vm54, %v289, 0
    %v617 = vsel %vm293, %v281, 0
    %619 = vmatprep.subr.bf16.mxu0 0
    %620 = vmatpush1.bf16.msra.mxu0 %v617
    %621 = vmatprep.subr.bf16.mxu0 0
    %622 = vmatpush1.bf16.msra.mxu0 0
    %623 = vmatprep.subr.bf16.mxu0 0
    %624 = vmatpush1.bf16.msra.mxu0 0
    %625 = vmatprep.subr.bf16.mxu0 0
    %626 = vmatpush1.bf16.msra.mxu0 0
    %627 = vmatprep.subr.bf16.mxu0 0
    %628 = vmatpush1.bf16.msra.mxu0 0
    %629 = vmatprep.subr.bf16.mxu0 0
    %630 = vmatpush1.bf16.msra.mxu0 0
    %631 = vmatprep.subr.bf16.mxu0 0
    %632 = vmatpush1.bf16.msra.mxu0 0
    %633 = vmatprep.subr.bf16.mxu0 0
    %634 = vmatpush1.bf16.msra.mxu0 0
    %635 = vmatprep.subr.bf16.mxu0 0
    %636 = vmatpush1.bf16.msra.mxu0 0
    %637 = vmatprep.subr.bf16.mxu0 0
    %638 = vmatpush1.bf16.msra.mxu0 0
    %639 = vmatprep.subr.bf16.mxu0 0
    %640 = vmatpush1.bf16.msra.mxu0 0
    %641 = vmatprep.subr.bf16.mxu0 0
    %642 = vmatpush1.bf16.msra.mxu0 0
    %643 = vmatprep.subr.bf16.mxu0 0
    %644 = vmatpush1.bf16.msra.mxu0 0
    %645 = vmatprep.subr.bf16.mxu0 0
    %646 = vmatpush1.bf16.msra.mxu0 0
    %647 = vmatprep.subr.bf16.mxu0 0
    %648 = vmatpush1.bf16.msra.mxu0 0
    %649 = vmatprep.subr.bf16.mxu0 0
    %650 = vmatpush1.bf16.msra.mxu0 0
    %651 = vmatprep.mubr.bf16.mxu0 0
    %652 = vmatmul.mubr.bf16.gmra.mrb[0].mxu0 %v614
    %v653 = vpop.f32.mrb[0].mxu0
    %v654 = vadd.f32 0.0, %v653
    %v655 = vpop.f32.mrb[0].mxu0
    %v656 = vpop.f32.mrb[0].mxu0
    %v657 = vpop.f32.mrb[0].mxu0
    %658 = vdwg.mxu0
    %v659 = vpack.c.bf16 %v332, %v332
    %v660 = vpack.c.bf16 %v378, %v378
    %v661 = vpack.c.bf16 %v424, %v424
    %v662 = vpack.c.bf16 %v470, %v470
    %v663 = vpack.c.bf16 %v516, %v516
    %v664 = vpack.c.bf16 %v562, %v562
    %v665 = vpack.c.bf16 %v608, %v608
    %v666 = vpack.c.bf16 %v654, %v654
    %667 = vmatprep.subr.bf16.mxu0 0
    %668 = vmatpush1.bf16.xpose.msra.mxu0 %v274
    %669 = vmatprep.subr.bf16.mxu0 0
    %670 = vmatpush1.bf16.xpose.msra.mxu0 0
    %671 = vmatprep.subr.bf16.mxu0 0
    %672 = vmatpush1.bf16.xpose.msra.mxu0 0
    %673 = vmatprep.subr.bf16.mxu0 0
    %674 = vmatpush1.bf16.xpose.msra.mxu0 0
    %675 = vmatprep.subr.bf16.mxu0 0
    %676 = vmatpush1.bf16.xpose.msra.mxu0 0
    %677 = vmatprep.subr.bf16.mxu0 0
    %678 = vmatpush1.bf16.xpose.msra.mxu0 0
    %679 = vmatprep.subr.bf16.mxu0 0
    %680 = vmatpush1.bf16.xpose.msra.mxu0 0
    %681 = vmatprep.subr.bf16.mxu0 0
    %682 = vmatpush1.bf16.xpose.msra.mxu0 0
    %683 = vmatprep.subr.bf16.mxu0 0
    %684 = vmatpush1.bf16.xpose.msra.mxu0 0
    %685 = vmatprep.subr.bf16.mxu0 0
    %686 = vmatpush1.bf16.xpose.msra.mxu0 0
    %687 = vmatprep.subr.bf16.mxu0 0
    %688 = vmatpush1.bf16.xpose.msra.mxu0 0
    %689 = vmatprep.subr.bf16.mxu0 0
    %690 = vmatpush1.bf16.xpose.msra.mxu0 0
    %691 = vmatprep.subr.bf16.mxu0 0
    %692 = vmatpush1.bf16.xpose.msra.mxu0 0
    %693 = vmatprep.subr.bf16.mxu0 0
    %694 = vmatpush1.bf16.xpose.msra.mxu0 0
    %695 = vmatprep.subr.bf16.mxu0 0
    %696 = vmatpush1.bf16.xpose.msra.mxu0 0
    %697 = vmatprep.subr.bf16.mxu0 0
    %698 = vmatpush1.bf16.xpose.msra.mxu0 0
    %699 = vmatprep.mubr.bf16.mxu0 0
    %700 = vmatmul.mubr.bf16.gmra.mrb[0].mxu0 %v659
    %v701 = vpop.f32.mrb[0].mxu0
    %v702 = vadd.f32 0.0, %v701
    %v703 = vpop.f32.mrb[0].mxu0
    %v704 = vpop.f32.mrb[0].mxu0
    %v705 = vpop.f32.mrb[0].mxu0
    %706 = vdwg.mxu0
    %707 = vmatprep.subr.bf16.mxu0 0
    %708 = vmatpush1.bf16.xpose.msra.mxu0 %v275
    %709 = vmatprep.subr.bf16.mxu0 0
    %710 = vmatpush1.bf16.xpose.msra.mxu0 0
    %711 = vmatprep.subr.bf16.mxu0 0
    %712 = vmatpush1.bf16.xpose.msra.mxu0 0
    %713 = vmatprep.subr.bf16.mxu0 0
    %714 = vmatpush1.bf16.xpose.msra.mxu0 0
    %715 = vmatprep.subr.bf16.mxu0 0
    %716 = vmatpush1.bf16.xpose.msra.mxu0 0
    %717 = vmatprep.subr.bf16.mxu0 0
    %718 = vmatpush1.bf16.xpose.msra.mxu0 0
    %719 = vmatprep.subr.bf16.mxu0 0
    %720 = vmatpush1.bf16.xpose.msra.mxu0 0
    %721 = vmatprep.subr.bf16.mxu0 0
    %722 = vmatpush1.bf16.xpose.msra.mxu0 0
    %723 = vmatprep.subr.bf16.mxu0 0
    %724 = vmatpush1.bf16.xpose.msra.mxu0 0
    %725 = vmatprep.subr.bf16.mxu0 0
    %726 = vmatpush1.bf16.xpose.msra.mxu0 0
    %727 = vmatprep.subr.bf16.mxu0 0
    %728 = vmatpush1.bf16.xpose.msra.mxu0 0
    %729 = vmatprep.subr.bf16.mxu0 0
    %730 = vmatpush1.bf16.xpose.msra.mxu0 0
    %731 = vmatprep.subr.bf16.mxu0 0
    %732 = vmatpush1.bf16.xpose.msra.mxu0 0
    %733 = vmatprep.subr.bf16.mxu0 0
    %734 = vmatpush1.bf16.xpose.msra.mxu0 0
    %735 = vmatprep.subr.bf16.mxu0 0
    %736 = vmatpush1.bf16.xpose.msra.mxu0 0
    %737 = vmatprep.subr.bf16.mxu0 0
    %738 = vmatpush1.bf16.xpose.msra.mxu0 0
    %739 = vmatprep.mubr.bf16.mxu0 0
    %740 = vmatmul.mubr.bf16.gmra.mrb[0].mxu0 %v660
    %v741 = vpop.f32.mrb[0].mxu0
    %v742 = vadd.f32 0.0, %v741
    %v743 = vpop.f32.mrb[0].mxu0
    %v744 = vpop.f32.mrb[0].mxu0
    %v745 = vpop.f32.mrb[0].mxu0
    %746 = vdwg.mxu0
    %747 = vmatprep.subr.bf16.mxu0 0
    %748 = vmatpush1.bf16.xpose.msra.mxu0 %v276
    %749 = vmatprep.subr.bf16.mxu0 0
    %750 = vmatpush1.bf16.xpose.msra.mxu0 0
    %751 = vmatprep.subr.bf16.mxu0 0
    %752 = vmatpush1.bf16.xpose.msra.mxu0 0
    %753 = vmatprep.subr.bf16.mxu0 0
    %754 = vmatpush1.bf16.xpose.msra.mxu0 0
    %755 = vmatprep.subr.bf16.mxu0 0
    %756 = vmatpush1.bf16.xpose.msra.mxu0 0
    %757 = vmatprep.subr.bf16.mxu0 0
    %758 = vmatpush1.bf16.xpose.msra.mxu0 0
    %759 = vmatprep.subr.bf16.mxu0 0
    %760 = vmatpush1.bf16.xpose.msra.mxu0 0
    %761 = vmatprep.subr.bf16.mxu0 0
    %762 = vmatpush1.bf16.xpose.msra.mxu0 0
    %763 = vmatprep.subr.bf16.mxu0 0
    %764 = vmatpush1.bf16.xpose.msra.mxu0 0
    %765 = vmatprep.subr.bf16.mxu0 0
    %766 = vmatpush1.bf16.xpose.msra.mxu0 0
    %767 = vmatprep.subr.bf16.mxu0 0
    %768 = vmatpush1.bf16.xpose.msra.mxu0 0
    %769 = vmatprep.subr.bf16.mxu0 0
    %770 = vmatpush1.bf16.xpose.msra.mxu0 0
    %771 = vmatprep.subr.bf16.mxu0 0
    %772 = vmatpush1.bf16.xpose.msra.mxu0 0
    %773 = vmatprep.subr.bf16.mxu0 0
    %774 = vmatpush1.bf16.xpose.msra.mxu0 0
    %775 = vmatprep.subr.bf16.mxu0 0
    %776 = vmatpush1.bf16.xpose.msra.mxu0 0
    %777 = vmatprep.subr.bf16.mxu0 0
    %778 = vmatpush1.bf16.xpose.msra.mxu0 0
    %779 = vmatprep.mubr.bf16.mxu0 0
    %780 = vmatmul.mubr.bf16.gmra.mrb[0].mxu0 %v661
    %v781 = vpop.f32.mrb[0].mxu0
    %v782 = vadd.f32 0.0, %v781
    %v783 = vpop.f32.mrb[0].mxu0
    %v784 = vpop.f32.mrb[0].mxu0
    %v785 = vpop.f32.mrb[0].mxu0
    %786 = vdwg.mxu0
    %787 = vmatprep.subr.bf16.mxu0 0
    %788 = vmatpush1.bf16.xpose.msra.mxu0 %v277
    %789 = vmatprep.subr.bf16.mxu0 0
    %790 = vmatpush1.bf16.xpose.msra.mxu0 0
    %791 = vmatprep.subr.bf16.mxu0 0
    %792 = vmatpush1.bf16.xpose.msra.mxu0 0
    %793 = vmatprep.subr.bf16.mxu0 0
    %794 = vmatpush1.bf16.xpose.msra.mxu0 0
    %795 = vmatprep.subr.bf16.mxu0 0
    %796 = vmatpush1.bf16.xpose.msra.mxu0 0
    %797 = vmatprep.subr.bf16.mxu0 0
    %798 = vmatpush1.bf16.xpose.msra.mxu0 0
    %799 = vmatprep.subr.bf16.mxu0 0
    %800 = vmatpush1.bf16.xpose.msra.mxu0 0
    %801 = vmatprep.subr.bf16.mxu0 0
    %802 = vmatpush1.bf16.xpose.msra.mxu0 0
    %803 = vmatprep.subr.bf16.mxu0 0
    %804 = vmatpush1.bf16.xpose.msra.mxu0 0
    %805 = vmatprep.subr.bf16.mxu0 0
    %806 = vmatpush1.bf16.xpose.msra.mxu0 0
    %807 = vmatprep.subr.bf16.mxu0 0
    %808 = vmatpush1.bf16.xpose.msra.mxu0 0
    %809 = vmatprep.subr.bf16.mxu0 0
    %810 = vmatpush1.bf16.xpose.msra.mxu0 0
    %811 = vmatprep.subr.bf16.mxu0 0
    %812 = vmatpush1.bf16.xpose.msra.mxu0 0
    %813 = vmatprep.subr.bf16.mxu0 0
    %814 = vmatpush1.bf16.xpose.msra.mxu0 0
    %815 = vmatprep.subr.bf16.mxu0 0
    %816 = vmatpush1.bf16.xpose.msra.mxu0 0
    %817 = vmatprep.subr.bf16.mxu0 0
    %818 = vmatpush1.bf16.xpose.msra.mxu0 0
    %819 = vmatprep.mubr.bf16.mxu0 0
    %820 = vmatmul.mubr.bf16.gmra.mrb[0].mxu0 %v662
    %v821 = vpop.f32.mrb[0].mxu0
    %v822 = vadd.f32 0.0, %v821
    %v823 = vpop.f32.mrb[0].mxu0
    %v824 = vpop.f32.mrb[0].mxu0
    %v825 = vpop.f32.mrb[0].mxu0
    %826 = vdwg.mxu0
    %827 = vmatprep.subr.bf16.mxu0 0
    %828 = vmatpush1.bf16.xpose.msra.mxu0 %v278
    %829 = vmatprep.subr.bf16.mxu0 0
    %830 = vmatpush1.bf16.xpose.msra.mxu0 0
    %831 = vmatprep.subr.bf16.mxu0 0
    %832 = vmatpush1.bf16.xpose.msra.mxu0 0
    %833 = vmatprep.subr.bf16.mxu0 0
    %834 = vmatpush1.bf16.xpose.msra.mxu0 0
    %835 = vmatprep.subr.bf16.mxu0 0
    %836 = vmatpush1.bf16.xpose.msra.mxu0 0
    %837 = vmatprep.subr.bf16.mxu0 0
    %838 = vmatpush1.bf16.xpose.msra.mxu0 0
    %839 = vmatprep.subr.bf16.mxu0 0
    %840 = vmatpush1.bf16.xpose.msra.mxu0 0
    %841 = vmatprep.subr.bf16.mxu0 0
    %842 = vmatpush1.bf16.xpose.msra.mxu0 0
    %843 = vmatprep.subr.bf16.mxu0 0
    %844 = vmatpush1.bf16.xpose.msra.mxu0 0
    %845 = vmatprep.subr.bf16.mxu0 0
    %846 = vmatpush1.bf16.xpose.msra.mxu0 0
    %847 = vmatprep.subr.bf16.mxu0 0
    %848 = vmatpush1.bf16.xpose.msra.mxu0 0
    %849 = vmatprep.subr.bf16.mxu0 0
    %850 = vmatpush1.bf16.xpose.msra.mxu0 0
    %851 = vmatprep.subr.bf16.mxu0 0
    %852 = vmatpush1.bf16.xpose.msra.mxu0 0
    %853 = vmatprep.subr.bf16.mxu0 0
    %854 = vmatpush1.bf16.xpose.msra.mxu0 0
    %855 = vmatprep.subr.bf16.mxu0 0
    %856 = vmatpush1.bf16.xpose.msra.mxu0 0
    %857 = vmatprep.subr.bf16.mxu0 0
    %858 = vmatpush1.bf16.xpose.msra.mxu0 0
    %859 = vmatprep.mubr.bf16.mxu0 0
    %860 = vmatmul.mubr.bf16.gmra.mrb[0].mxu0 %v663
    %v861 = vpop.f32.mrb[0].mxu0
    %v862 = vadd.f32 0.0, %v861
    %v863 = vpop.f32.mrb[0].mxu0
    %v864 = vpop.f32.mrb[0].mxu0
    %v865 = vpop.f32.mrb[0].mxu0
    %866 = vdwg.mxu0
    %867 = vmatprep.subr.bf16.mxu0 0
    %868 = vmatpush1.bf16.xpose.msra.mxu0 %v279
    %869 = vmatprep.subr.bf16.mxu0 0
    %870 = vmatpush1.bf16.xpose.msra.mxu0 0
    %871 = vmatprep.subr.bf16.mxu0 0
    %872 = vmatpush1.bf16.xpose.msra.mxu0 0
    %873 = vmatprep.subr.bf16.mxu0 0
    %874 = vmatpush1.bf16.xpose.msra.mxu0 0
    %875 = vmatprep.subr.bf16.mxu0 0
    %876 = vmatpush1.bf16.xpose.msra.mxu0 0
    %877 = vmatprep.subr.bf16.mxu0 0
    %878 = vmatpush1.bf16.xpose.msra.mxu0 0
    %879 = vmatprep.subr.bf16.mxu0 0
    %880 = vmatpush1.bf16.xpose.msra.mxu0 0
    %881 = vmatprep.subr.bf16.mxu0 0
    %882 = vmatpush1.bf16.xpose.msra.mxu0 0
    %883 = vmatprep.subr.bf16.mxu0 0
    %884 = vmatpush1.bf16.xpose.msra.mxu0 0
    %885 = vmatprep.subr.bf16.mxu0 0
    %886 = vmatpush1.bf16.xpose.msra.mxu0 0
    %887 = vmatprep.subr.bf16.mxu0 0
    %888 = vmatpush1.bf16.xpose.msra.mxu0 0
    %889 = vmatprep.subr.bf16.mxu0 0
    %890 = vmatpush1.bf16.xpose.msra.mxu0 0
    %891 = vmatprep.subr.bf16.mxu0 0
    %892 = vmatpush1.bf16.xpose.msra.mxu0 0
    %893 = vmatprep.subr.bf16.mxu0 0
    %894 = vmatpush1.bf16.xpose.msra.mxu0 0
    %895 = vmatprep.subr.bf16.mxu0 0
    %896 = vmatpush1.bf16.xpose.msra.mxu0 0
    %897 = vmatprep.subr.bf16.mxu0 0
    %898 = vmatpush1.bf16.xpose.msra.mxu0 0
    %899 = vmatprep.mubr.bf16.mxu0 0
    %900 = vmatmul.mubr.bf16.gmra.mrb[0].mxu0 %v664
    %v901 = vpop.f32.mrb[0].mxu0
    %v902 = vadd.f32 0.0, %v901
    %v903 = vpop.f32.mrb[0].mxu0
    %v904 = vpop.f32.mrb[0].mxu0
    %v905 = vpop.f32.mrb[0].mxu0
    %906 = vdwg.mxu0
    %907 = vmatprep.subr.bf16.mxu0 0
    %908 = vmatpush1.bf16.xpose.msra.mxu0 %v280
    %909 = vmatprep.subr.bf16.mxu0 0
    %910 = vmatpush1.bf16.xpose.msra.mxu0 0
    %911 = vmatprep.subr.bf16.mxu0 0
    %912 = vmatpush1.bf16.xpose.msra.mxu0 0
    %913 = vmatprep.subr.bf16.mxu0 0
    %914 = vmatpush1.bf16.xpose.msra.mxu0 0
    %915 = vmatprep.subr.bf16.mxu0 0
    %916 = vmatpush1.bf16.xpose.msra.mxu0 0
    %917 = vmatprep.subr.bf16.mxu0 0
    %918 = vmatpush1.bf16.xpose.msra.mxu0 0
    %919 = vmatprep.subr.bf16.mxu0 0
    %920 = vmatpush1.bf16.xpose.msra.mxu0 0
    %921 = vmatprep.subr.bf16.mxu0 0
    %922 = vmatpush1.bf16.xpose.msra.mxu0 0
    %923 = vmatprep.subr.bf16.mxu0 0
    %924 = vmatpush1.bf16.xpose.msra.mxu0 0
    %925 = vmatprep.subr.bf16.mxu0 0
    %926 = vmatpush1.bf16.xpose.msra.mxu0 0
    %927 = vmatprep.subr.bf16.mxu0 0
    %928 = vmatpush1.bf16.xpose.msra.mxu0 0
    %929 = vmatprep.subr.bf16.mxu0 0
    %930 = vmatpush1.bf16.xpose.msra.mxu0 0
    %931 = vmatprep.subr.bf16.mxu0 0
    %932 = vmatpush1.bf16.xpose.msra.mxu0 0
    %933 = vmatprep.subr.bf16.mxu0 0
    %934 = vmatpush1.bf16.xpose.msra.mxu0 0
    %935 = vmatprep.subr.bf16.mxu0 0
    %936 = vmatpush1.bf16.xpose.msra.mxu0 0
    %937 = vmatprep.subr.bf16.mxu0 0
    %938 = vmatpush1.bf16.xpose.msra.mxu0 0
    %939 = vmatprep.mubr.bf16.mxu0 0
    %940 = vmatmul.mubr.bf16.gmra.mrb[0].mxu0 %v665
    %v941 = vpop.f32.mrb[0].mxu0
    %v942 = vadd.f32 0.0, %v941
    %v943 = vpop.f32.mrb[0].mxu0
    %v944 = vpop.f32.mrb[0].mxu0
    %v945 = vpop.f32.mrb[0].mxu0
    %946 = vdwg.mxu0
    %947 = vmatprep.subr.bf16.mxu0 0
    %948 = vmatpush1.bf16.xpose.msra.mxu0 %v281
    %949 = vmatprep.subr.bf16.mxu0 0
    %950 = vmatpush1.bf16.xpose.msra.mxu0 0
    %951 = vmatprep.subr.bf16.mxu0 0
    %952 = vmatpush1.bf16.xpose.msra.mxu0 0
    %953 = vmatprep.subr.bf16.mxu0 0
    %954 = vmatpush1.bf16.xpose.msra.mxu0 0
    %955 = vmatprep.subr.bf16.mxu0 0
    %956 = vmatpush1.bf16.xpose.msra.mxu0 0
    %957 = vmatprep.subr.bf16.mxu0 0
    %958 = vmatpush1.bf16.xpose.msra.mxu0 0
    %959 = vmatprep.subr.bf16.mxu0 0
    %960 = vmatpush1.bf16.xpose.msra.mxu0 0
    %961 = vmatprep.subr.bf16.mxu0 0
    %962 = vmatpush1.bf16.xpose.msra.mxu0 0
    %963 = vmatprep.subr.bf16.mxu0 0
    %964 = vmatpush1.bf16.xpose.msra.mxu0 0
    %965 = vmatprep.subr.bf16.mxu0 0
    %966 = vmatpush1.bf16.xpose.msra.mxu0 0
    %967 = vmatprep.subr.bf16.mxu0 0
    %968 = vmatpush1.bf16.xpose.msra.mxu0 0
    %969 = vmatprep.subr.bf16.mxu0 0
    %970 = vmatpush1.bf16.xpose.msra.mxu0 0
    %971 = vmatprep.subr.bf16.mxu0 0
    %972 = vmatpush1.bf16.xpose.msra.mxu0 0
    %973 = vmatprep.subr.bf16.mxu0 0
    %974 = vmatpush1.bf16.xpose.msra.mxu0 0
    %975 = vmatprep.subr.bf16.mxu0 0
    %976 = vmatpush1.bf16.xpose.msra.mxu0 0
    %977 = vmatprep.subr.bf16.mxu0 0
    %978 = vmatpush1.bf16.xpose.msra.mxu0 0
    %979 = vmatprep.mubr.bf16.mxu0 0
    %980 = vmatmul.mubr.bf16.gmra.mrb[0].mxu0 %v666
    %v981 = vpop.f32.mrb[0].mxu0
    %v982 = vadd.f32 0.0, %v981
    %v983 = vpop.f32.mrb[0].mxu0
    %v984 = vpop.f32.mrb[0].mxu0
    %v985 = vpop.f32.mrb[0].mxu0
    %986 = vdwg.mxu0
    %v987 = vand.u32 2147483647, %v702
    %v988 = vand.u32 2147483647, %v742
    %v989 = vand.u32 2147483647, %v782
    %v990 = vand.u32 2147483647, %v822
    %v991 = vand.u32 2147483647, %v862
    %v992 = vand.u32 2147483647, %v902
    %v993 = vand.u32 2147483647, %v942
    %v994 = vand.u32 2147483647, %v982
    %v995 = vsel %vm54, %v987, 0.0
    %996 = vadd.xlane.f32.xlu0 %v995
    %v997 = vpop.xlane.xlu0 %996
    %v998 = vsel %vm54, %v988, 0.0
    %999 = vadd.xlane.f32.xlu0 %v998
    %v1000 = vpop.xlane.xlu0 %999
    %v1001 = vsel %vm54, %v989, 0.0
    %1002 = vadd.xlane.f32.xlu0 %v1001
    %v1003 = vpop.xlane.xlu0 %1002
    %v1004 = vsel %vm54, %v990, 0.0
    %1005 = vadd.xlane.f32.xlu0 %v1004
    %v1006 = vpop.xlane.xlu0 %1005
    %v1007 = vsel %vm54, %v991, 0.0
    %1008 = vadd.xlane.f32.xlu0 %v1007
    %v1009 = vpop.xlane.xlu0 %1008
    %v1010 = vsel %vm54, %v992, 0.0
    %1011 = vadd.xlane.f32.xlu0 %v1010
    %v1012 = vpop.xlane.xlu0 %1011
    %v1013 = vsel %vm54, %v993, 0.0
    %1014 = vadd.xlane.f32.xlu0 %v1013
    %v1015 = vpop.xlane.xlu0 %1014
    %v1016 = vsel %vm54, %v994, 0.0
    %1017 = vadd.xlane.f32.xlu0 %v1016
    %v1018 = vpop.xlane.xlu0 %1017
    %v1027 = vlaneseq
    %v1028 = vand.u32 %v1027, 127
    %v1029 = vlaneseq
    %v1030 = vshrl.u32 %v1029, 7
    %v1031 = vsub.s32 %v1028, %v1030
    %v1032 = vrot.slane %v997, %v1031
    %v1033 = vlaneseq
    %v1034 = vshrl.u32 %v1033, 7
    %v1035 = vsub.s32 %v1028, %v1034
    %v1036 = vrot.slane %v1000, %v1035
    %v1037 = vlaneseq
    %v1038 = vshrl.u32 %v1037, 7
    %v1039 = vsub.s32 %v1028, %v1038
    %v1040 = vrot.slane %v1003, %v1039
    %v1041 = vlaneseq
    %v1042 = vshrl.u32 %v1041, 7
    %v1043 = vsub.s32 %v1028, %v1042
    %v1044 = vrot.slane %v1006, %v1043
    %v1045 = vlaneseq
    %v1046 = vshrl.u32 %v1045, 7
    %v1047 = vsub.s32 %v1028, %v1046
    %v1048 = vrot.slane %v1009, %v1047
    %v1049 = vlaneseq
    %v1050 = vshrl.u32 %v1049, 7
    %v1051 = vsub.s32 %v1028, %v1050
    %v1052 = vrot.slane %v1012, %v1051
    %v1053 = vlaneseq
    %v1054 = vshrl.u32 %v1053, 7
    %v1055 = vsub.s32 %v1028, %v1054
    %v1056 = vrot.slane %v1015, %v1055
    %v1057 = vlaneseq
    %v1058 = vshrl.u32 %v1057, 7
    %v1059 = vsub.s32 %v1028, %v1058
    %v1060 = vrot.slane %v1018, %v1059
    %vm1061 = vcmask 1041409
    %v1062 = vsel %vm1061, %v1036, %v1032
    %vm1063 = vcmask 1042434
    %v1064 = vsel %vm1063, %v1040, %v1062
    %vm1065 = vcmask 1043459
    %v1066 = vsel %vm1065, %v1044, %v1064
    %vm1067 = vcmask 1044484
    %v1068 = vsel %vm1067, %v1048, %v1066
    %vm1069 = vcmask 1045509
    %v1070 = vsel %vm1069, %v1052, %v1068
    %vm1071 = vcmask 1046534
    %v1072 = vsel %vm1071, %v1056, %v1070
    %vm1073 = vcmask 1047559
    %v1074 = vsel %vm1073, %v1060, %v1072
    %v1076 = vsel %vm54, %v1074, 0.0
    %1077 = vadd.xlane.f32.xlu0 %v1076
    %v1078 = vpop.xlane.xlu0 %1077
    %v1079 = vmul.f32 %v1078, 0.0078125
    %vm1080 = vcmask 7168
    %1081 = vst.msk [vmem:[%s3] sm:$0xff] %vm1080, %v1079
    // Predicated region
    $region26: #{tpu_custom_call.1} parent=1 // pred_check
      _
    $region27: #{tpu_custom_call.1} parent=1 // pred_check_branch
      %1083 = sbr.rel (0) target = $region29
    $region28: #{tpu_custom_call.1} parent=1 // pred_region
      _
    $region29: #{tpu_custom_call.1} parent=1 // pred_fallthru
      _
    // Predicated region
    $region30: #{tpu_custom_call.1} parent=1 // pred_check
      _
    $region31: #{tpu_custom_call.1} parent=1 // pred_check_branch
      %1085 = sbr.rel (0) target = $region33
    $region32: #{tpu_custom_call.1} parent=1 // pred_region
      _
    $region33: #{tpu_custom_call.1} parent=1 // pred_fallthru
      _
    %1086 = vsyncpa [#allocation3], 1
    %1087 = vsyncpa [#allocation5], 1

</llo_original>
